<compile_context>
chip_gen: v6e
topology: v6e:2x2x1
jax: 0.10.0
libtpu: 0.0.40
codegen_flags: <defaults>
</compile_context>

<pallas_src>
import functools

import jax
import jax.numpy as jnp
from jax.experimental import pallas as pl
from jax.experimental.pallas import tpu as pltpu


def _round_up(x, n):
    return ((x + n - 1) // n) * n


def _cosface_kernel(label_ref, cos_ref, out_ref, *, s, ms, tc):
    """Process one (tb, tc) tile of the (B, C) cosine matrix."""
    dt = cos_ref.dtype
    # Shift the scalar column, not the tile: local label index for this class
    # tile.  label == -1 (unlabeled) can never match a local column in [0, tc).
    lab_local = label_ref[...] - pl.program_id(1) * tc          # (tb, 1) int32
    col = jax.lax.broadcasted_iota(jnp.int32, cos_ref.shape, 1)  # grid-invariant
    hit = col == lab_local
    # Fold scale into the margin: out = cos*s - (m*s if hit else 0).
    out_ref[...] = cos_ref[...] * jnp.asarray(s, dt) - jnp.where(
        hit, jnp.asarray(ms, dt), jnp.asarray(0, dt))


def cosface(cosine, label, *, s=64.0, m=0.4, tb=None, tc=None,
            donate_cosine=True, target_block_bytes=4 * 1024 * 1024):
    """cosine: (B, C) float, label: (B,) int (-1 marks 'no label')."""
    B, C = cosine.shape
    itemsize = jnp.dtype(cosine.dtype).itemsize
    sublane = max(8, 32 // itemsize)          # f32: 8, bf16: 16, int8/fp8: 32

    # Batch tile: sublane-aligned, capped at 256 rows.
    if tb is None:
        tb = min(256, _round_up(B, sublane))
    # Class tile: lane-dense multiple of 128, targeting a constant block byte
    # size so amortization is dtype-independent; never full-extent fallback.
    if tc is None:
        tc_target = max(128, (target_block_bytes // (tb * itemsize)) // 128 * 128)
        tc = min(tc_target, _round_up(C, 128))
        # Megacore: when everything fits in a single block, split the class
        # axis so a 2-TensorCore chip (v7x) can shard the grid.
        if pl.cdiv(B, tb) == 1 and pl.cdiv(C, tc) == 1 and C > 128:
            tc = max(128, _round_up(pl.cdiv(C, 2), 128))

    label2d = label.reshape(B, 1).astype(jnp.int32)
    grid = (pl.cdiv(B, tb), pl.cdiv(C, tc))

    cost = pl.CostEstimate(
        flops=2 * B * C,
        transcendentals=0,
        bytes_accessed=2 * B * C * itemsize + B * 4,
    )

    return pl.pallas_call(
        functools.partial(_cosface_kernel, s=float(s), ms=float(m) * float(s), tc=tc),
        out_shape=jax.ShapeDtypeStruct((B, C), cosine.dtype),
        grid=grid,
        in_specs=[
            # Label column: block index constant over the class axis -> the
            # tiny label DMA is reused across the whole row of class tiles.
            pl.BlockSpec((tb, 1), lambda i, j: (i, 0)),
            # Cosine tile.
            pl.BlockSpec((tb, tc), lambda i, j: (i, j)),
        ],
        out_specs=pl.BlockSpec((tb, tc), lambda i, j: (i, j)),
        compiler_params=pltpu.CompilerParams(
            dimension_semantics=("parallel", "parallel"),
            vmem_limit_bytes=48 * 1024 * 1024),
        cost_estimate=cost,
        input_output_aliases=({1: 0} if donate_cosine else {}),
    )(label2d, cosine)


def _reference(cosine, label, s=64.0, m=0.4):
    B, C = cosine.shape
    col = jnp.arange(C)[None, :]
    hit = (col == label[:, None]) & (label[:, None] != -1)
    return (cosine - jnp.where(hit, m, 0.0)) * s


if __name__ == "__main__":
    key = jax.random.PRNGKey(0)
    k1, k2, k3, k4 = jax.random.split(key, 4)

    # 1) Small aligned shape: auto tiles (exercises the megacore class split).
    B, C = 16, 256
    cosine = jax.random.uniform(k1, (B, C), dtype=jnp.float32,
                                minval=-1.0, maxval=1.0)
    label = jax.random.randint(k2, (B,), 0, C, dtype=jnp.int32)
    label = label.at[1].set(-1).at[5].set(-1)   # unlabeled rows (torch: label != -1)
    ref = _reference(cosine, label, s=64.0, m=0.4)

    out_auto = jax.block_until_ready(cosface(cosine, label, s=64.0, m=0.4))
    assert jnp.allclose(out_auto, ref, atol=1e-5), "mismatch (auto tiles)"

    out_keep = jax.block_until_ready(
        cosface(cosine, label, s=64.0, m=0.4, donate_cosine=False))
    assert jnp.allclose(out_keep, ref, atol=1e-5), "mismatch (no donation)"

    # 2) Forced small tiles: exercises the 2-D grid and column-offset logic.
    out_tiled = jax.block_until_ready(
        cosface(cosine, label, s=64.0, m=0.4, tb=8, tc=128))
    assert jnp.allclose(out_tiled, ref, atol=1e-5), "mismatch (forced 2-D grid)"

    # 3) Non-aligned shape: boundary blocks are masked (no full-extent fallback).
    B2, C2 = 12, 300
    cosine2 = jax.random.uniform(k3, (B2, C2), dtype=jnp.float32,
                                 minval=-1.0, maxval=1.0)
    label2 = jax.random.randint(k4, (B2,), 0, C2, dtype=jnp.int32)
    label2 = label2.at[0].set(-1)
    ref2 = _reference(cosine2, label2, s=64.0, m=0.4)
    out2 = jax.block_until_ready(cosface(cosine2, label2, s=64.0, m=0.4))
    assert jnp.allclose(out2, ref2, atol=1e-5), "mismatch (non-aligned shape)"

    print("KERNEL_OK")
</pallas_src>

<mosaic_0001>
module attributes {stable_mosaic.version = 11 : i64} {
  func.func @_cosface_kernel(%arg0: i32, %arg1: i32, %arg2: memref<16x1xi32, #tpu.memory_space<vmem>>, %arg3: memref<16x128xf32, #tpu.memory_space<vmem>>, %arg4: memref<16x128xf32, #tpu.memory_space<vmem>>) attributes {dimension_semantics = [#tpu.dimension_semantics<parallel>, #tpu.dimension_semantics<parallel>], iteration_bounds = array<i64: 1, 2>, scalar_prefetch = 0 : i64, scratch_operands = 0 : i64, tpu.core_type = #tpu.core_type<tc>, window_params = [{transform_indices = @transform_0, window_bounds = array<i64: 16, 1>}, {transform_indices = @transform_1, window_bounds = array<i64: 16, 128>}, {transform_indices = @transform_2, window_bounds = array<i64: 16, 128>}]} {
    %c0 = arith.constant 0 : index
    %c0_0 = arith.constant 0 : index
    %0 = vector.load %arg2[%c0, %c0_0] : memref<16x1xi32, #tpu.memory_space<vmem>>, vector<16x1xi32>
    %c128_i32 = arith.constant 128 : i32
    %1 = arith.muli %arg1, %c128_i32 : i32
    %2 = vector.broadcast %1 : i32 to vector<16x1xi32>
    %3 = arith.subi %0, %2 : vector<16x1xi32>
    %4 = tpu.iota {dimensions = array<i32: 1>} : vector<16x128xi32>
    %5 = vector.broadcast %3 : vector<16x1xi32> to vector<16x128xi32>
    %6 = arith.cmpi eq, %4, %5 : vector<16x128xi32>
    %c0_1 = arith.constant 0 : index
    %c0_2 = arith.constant 0 : index
    %7 = vector.load %arg3[%c0_1, %c0_2] : memref<16x128xf32, #tpu.memory_space<vmem>>, vector<16x128xf32>
    %cst = arith.constant 6.400000e+01 : f32
    %8 = vector.broadcast %cst : f32 to vector<16x128xf32>
    %9 = arith.mulf %7, %8 : vector<16x128xf32>
    %cst_3 = arith.constant 2.560000e+01 : f32
    %cst_4 = arith.constant 0.000000e+00 : f32
    %10 = vector.broadcast %cst_3 : f32 to vector<16x128xf32>
    %11 = vector.broadcast %cst_4 : f32 to vector<16x128xf32>
    %12 = arith.select %6, %10, %11 : vector<16x128xi1>, vector<16x128xf32>
    %13 = arith.subf %9, %12 : vector<16x128xf32>
    %c0_5 = arith.constant 0 : index
    %c0_6 = arith.constant 0 : index
    %14 = vector.load %arg4[%c0_5, %c0_6] : memref<16x128xf32, #tpu.memory_space<vmem>>, vector<16x128xf32>
    tpu.vector_store %arg4[%c0_5, %c0_6], %13 {strides = array<i32>} : memref<16x128xf32, #tpu.memory_space<vmem>>, vector<16x128xf32>,
    return
  }
  func.func @transform_0(%arg0: i32, %arg1: i32) -> (i32, i32) {
    %c0_i32 = arith.constant 0 : i32
    %c0_i32_0 = arith.constant 0 : i32
    return %arg0, %c0_i32 : i32, i32
  }
  func.func @transform_1(%arg0: i32, %arg1: i32) -> (i32, i32) {
    %c0_i32 = arith.constant 0 : i32
    return %arg0, %arg1 : i32, i32
  }
  func.func @transform_2(%arg0: i32, %arg1: i32) -> (i32, i32) {
    %c0_i32 = arith.constant 0 : i32
    return %arg0, %arg1 : i32, i32
  }
}

</mosaic_0001>

<llo_original>
// kernel: tpu_custom_call.1
$region0: #{tpu_custom_call.1}
  #allocation0 [shape = 'u32[]', space=smem, size = 0x4, offset = 0x4, fixed_abs, tag = 'smem constant byte address 0x4 - core index']
  #allocation1 [shape = 'u32[144,128]{1,0:T(1,128)}', space=vmem, size = 0x12000, scoped, tag = 'internal scratch']
  %s0 = inlined_call_operand.vmem [shape: s32[16,1], index: 0, kind: input, shape index: {}]
  %s1 = inlined_call_operand.hbm [shape: f32[16,256], index: 1, kind: input, shape index: {}, may-alias: {1,2}]
  %s2 = inlined_call_operand.hbm [shape: f32[16,256], index: 2, kind: output, shape index: {}, may-alias: {1,2}]
  %s3 = sld [smem:[#allocation0]]
  $region45: #{tpu_custom_call.1} parent=0
    _
  %s5 = ssub.s32 1, %s3
  %s6 = scalar_select 0, %s5, %s3
  $region1: #{tpu_custom_call.1} parent=0
    #allocation2 [shape = 'u8[16384]{0}', space=vmem, size = 0x4000, scoped, tag = 'input window, operand 1']
    #allocation3 [shape = 's32[2]{0}', space=sflag, size = 0x8, scoped, tag = 'scoped memory for tpu_custom_call.1']
    #allocation4 [shape = 's32[2]{0}', space=sflag, size = 0x8, scoped, tag = 'scoped memory for tpu_custom_call.1']
    #allocation5 [shape = 'u8[16384]{0}', space=vmem, size = 0x4000, scoped, tag = 'output window, operand 0']
    %7 = vsyncpa [#allocation3], 0
    %s8 = scalar_lea.sflag [#allocation3], 1
    %9 = vsyncpa %s8, 0
    %10 = vsyncpa [#allocation4], 0
    %s11 = scalar_lea.sflag [#allocation4], 1
    %12 = vsyncpa %s11, 0
    loop: start=0, step=1, limit=4
    $region2: #{tpu_custom_call.1} parent=1 // loop_pre_header
      _
    $region3: #{tpu_custom_call.1} parent=1 // loop_header
      %s14 = sphi 0, %s18
      %p15 = scmp.ge.s32.totalorder %s14, 4
      %s21 = sphi 0, %s33
      %s22 = sphi 0, %s29
      %s23 = sphi 0, %s21
      %s24 = sphi 0, %s22
      %s25 = sphi 0, %s23
      %s26 = sphi 0, %s24
      %s36 = sphi 0, %s38
      %s39 = sphi 0, %s36
      %s40 = sphi 0, %s39
      %s56 = sphi 0, %s40
      %s64 = sphi 0, %s66
      %s67 = sphi 0, %s64
      %s68 = sphi 0, %s67
      %s84 = sphi 0, %s68
      %s92 = sphi 0, %s94
      %s95 = sphi 0, %s92
      %s96 = sphi 0, %s95
      %s112 = sphi 0, %s96
    $region4: #{tpu_custom_call.1} parent=1 // loop_header_branch
      %17 = sbr.rel (%p15) target = $region8
    $region5: #{tpu_custom_call.1} parent=1 // loop_body
      %s19 = ssub.s32 %s14, 1
      %s20 = ssub.s32 %s14, 2
      %s27 = sadd.s32 1, %s22
      %p28 = scmp.ge.s32.totalorder %s27, 2
      %s29 = scalar_select %p28, 0, %s27
      %s30 = sadd.s32 1, %s21
      %s31 = scalar_select %p28, %s30, %s21
      %p32 = scmp.ge.s32.totalorder %s31, 1
      %s33 = scalar_select %p32, 0, %s31
      %s34 = ssub.s32 %s21, %s33
      %p35 = scmp.eq.s32.totalorder %s34, 0
      %s37 = sadd.s32 %s36, 1
      %s38 = scalar_select %p35, %s36, %s37
      %p41 = pneg %p35
      %p42 = scmp.eq.s32.totalorder %s14, 1
      %p43 = por %p41, %p42
      %p44 = scmp.ne.s32.totalorder %s36, %s39
      %p45 = scmp.eq.s32.totalorder %s14, 0
      %p46 = por %p44, %p45
      %p47 = scmp.ne.s32.totalorder %s36, %s39
      %p48 = scmp.eq.s32.totalorder %s19, 1
      %p49 = por %p47, %p48
      %p50 = scmp.ne.s32.totalorder %s39, %s40
      %p51 = scmp.eq.s32.totalorder %s19, 0
      %p52 = por %p50, %p51
      %p53 = scmp.ne.s32.totalorder %s39, %s40
      %p54 = scmp.eq.s32.totalorder %s20, 1
      %p55 = por %p53, %p54
      %p57 = scmp.ne.s32.totalorder %s40, %s56
      %p58 = scmp.eq.s32.totalorder %s20, 0
      %p59 = por %p57, %p58
      %s60 = ssub.s32 %s21, %s33
      %s61 = ssub.s32 %s22, %s29
      %s62 = sor.u32 %s60, %s61
      %p63 = scmp.eq.s32.totalorder %s62, 0
      %s65 = sadd.s32 %s64, 1
      %s66 = scalar_select %p63, %s64, %s65
      %p69 = pneg %p63
      %p70 = scmp.eq.s32.totalorder %s14, 1
      %p71 = por %p69, %p70
      %p72 = scmp.ne.s32.totalorder %s64, %s67
      %p73 = scmp.eq.s32.totalorder %s14, 0
      %p74 = por %p72, %p73
      %p75 = scmp.ne.s32.totalorder %s64, %s67
      %p76 = scmp.eq.s32.totalorder %s19, 1
      %p77 = por %p75, %p76
      %p78 = scmp.ne.s32.totalorder %s67, %s68
      %p79 = scmp.eq.s32.totalorder %s19, 0
      %p80 = por %p78, %p79
      %p81 = scmp.ne.s32.totalorder %s67, %s68
      %p82 = scmp.eq.s32.totalorder %s20, 1
      %p83 = por %p81, %p82
      %p85 = scmp.ne.s32.totalorder %s68, %s84
      %p86 = scmp.eq.s32.totalorder %s20, 0
      %p87 = por %p85, %p86
      %s88 = ssub.s32 %s21, %s33
      %s89 = ssub.s32 %s22, %s29
      %s90 = sor.u32 %s88, %s89
      %p91 = scmp.eq.s32.totalorder %s90, 0
      %s93 = sadd.s32 %s92, 1
      %s94 = scalar_select %p91, %s92, %s93
      %p97 = pneg %p91
      %p98 = scmp.eq.s32.totalorder %s14, 1
      %p99 = por %p97, %p98
      %p100 = scmp.ne.s32.totalorder %s92, %s95
      %p101 = scmp.eq.s32.totalorder %s14, 0
      %p102 = por %p100, %p101
      %p103 = scmp.ne.s32.totalorder %s92, %s95
      %p104 = scmp.eq.s32.totalorder %s19, 1
      %p105 = por %p103, %p104
      %p106 = scmp.ne.s32.totalorder %s95, %s96
      %p107 = scmp.eq.s32.totalorder %s19, 0
      %p108 = por %p106, %p107
      %p109 = scmp.ne.s32.totalorder %s95, %s96
      %p110 = scmp.eq.s32.totalorder %s20, 1
      %p111 = por %p109, %p110
      %p113 = scmp.ne.s32.totalorder %s96, %s112
      %p114 = scmp.eq.s32.totalorder %s20, 0
      %p115 = por %p113, %p114
      %p116 = scmp.le.s32.totalorder 1, %s14
      %p117 = scmp.lt.s32.totalorder %s14, 3
      %p118 = pnand %p116, %p117
      %p119 = pneg %p118
      // Predicated region
      $region9: #{tpu_custom_call.1} parent=5 // pred_check
        _
      $region10: #{tpu_custom_call.1} parent=5 // pred_check_branch
        %121 = sbr.rel (%p118) target = $region12
      $region11: #{tpu_custom_call.1} parent=5 // pred_region
        %s122 = ssub.s32 %s14, 1
        // Predicated region
        $region13: #{tpu_custom_call.1} parent=11 // pred_check
          %p123 = pneg %p52
        $region14: #{tpu_custom_call.1} parent=11 // pred_check_branch
          %125 = sbr.rel (%p123) target = $region16
        $region15: #{tpu_custom_call.1} parent=11 // pred_region
          %s126 = smul.u32 2, %s23
          %p127 = scmp.lt.s32.totalorder %s126, 1
          %s128 = scalar_select %p127, %s126, 1
          %s129 = smul.addr %s128, 8
          %s130 = scalar_lea.vmem %s0, %s129
          %s131 = smul.u32 2, %s23
        $region16: #{tpu_custom_call.1} parent=11 // pred_fallthru
          _
      $region12: #{tpu_custom_call.1} parent=5 // pred_fallthru
        _
      %p132 = scmp.lt.s32.totalorder %s14, 2
      // Predicated region
      $region17: #{tpu_custom_call.1} parent=5 // pred_check
        %p133 = pneg %p132
      $region18: #{tpu_custom_call.1} parent=5 // pred_check_branch
        %135 = sbr.rel (%p133) target = $region20
      $region19: #{tpu_custom_call.1} parent=5 // pred_region
        // Predicated region
        $region21: #{tpu_custom_call.1} parent=19 // pred_check
          %p136 = pneg %p74
        $region22: #{tpu_custom_call.1} parent=19 // pred_check_branch
          %138 = sbr.rel (%p136) target = $region24
        $region23: #{tpu_custom_call.1} parent=19 // pred_region
          %s139 = sand.u32 %s64, 1
          %s140 = scalar_lea.sflag [#allocation3], %s139
          %s141 = sand.u32 %s64, 1
          %s142 = smul.addr %s141, 16
          %s143 = scalar_lea.vmem [#allocation2], %s142
          %s144 = smul.u32 2, %s21
          %s146 = ssub.s32 256, 256
          %147 = vsyncadd %s140, %s146
          %s148 = smul.addr %s144, 2
          %s149 = sadd.s32 %s22, %s148
          %s150 = smul.addr %s149, 128
          %s151 = scalar_lea.hbm %s1, %s150
          %s152 = sshll.u32 %s143, 4
          %s153 = int_to_ptr.vmem [resolvable:$true] %s152
          %158 = dma.hbm_to_vmem [thread:$0]  %s151, 256, %s153, %s140, 256, 128, 8
        $region24: #{tpu_custom_call.1} parent=19 // pred_fallthru
          _
      $region20: #{tpu_custom_call.1} parent=5 // pred_fallthru
        _
      %p159 = scmp.le.s32.totalorder 1, %s14
      %p160 = scmp.lt.s32.totalorder %s14, 3
      %p161 = pnand %p159, %p160
      %p162 = pneg %p161
      // Predicated region
      $region25: #{tpu_custom_call.1} parent=5 // pred_check
        _
      $region26: #{tpu_custom_call.1} parent=5 // pred_check_branch
        %164 = sbr.rel (%p161) target = $region28
      $region27: #{tpu_custom_call.1} parent=5 // pred_region
        %s165 = ssub.s32 %s14, 1
        %s166 = sand.u32 %s67, 1
        %s167 = scalar_lea.sflag [#allocation3], %s166
        %s168 = sand.u32 %s67, 1
        %s169 = smul.addr %s168, 16
        %s170 = scalar_lea.vmem [#allocation2], %s169
        // Predicated region
        $region29: #{tpu_custom_call.1} parent=27 // pred_check
          %p171 = pneg %p80
        $region30: #{tpu_custom_call.1} parent=27 // pred_check_branch
          %173 = sbr.rel (%p171) target = $region32
        $region31: #{tpu_custom_call.1} parent=27 // pred_region
          %174 = dma.done %s167, 256
        $region32: #{tpu_custom_call.1} parent=27 // pred_fallthru
          _
        %s175 = smul.u32 2, %s23
        %p176 = scmp.lt.s32.totalorder %s175, 1
        %s177 = scalar_select %p176, %s175, 1
        %s178 = smul.addr %s177, 8
        %s179 = scalar_lea.vmem %s0, %s178
        %p180 = pneg %p52
        %p181 = pneg %p49
        %s182 = sand.u32 %s67, 1
        %s183 = scalar_lea.sflag [#allocation3], %s182
        %s184 = sand.u32 %s67, 1
        %s185 = smul.addr %s184, 16
        %s186 = scalar_lea.vmem [#allocation2], %s185
        %p187 = pneg %p80
        %p188 = pneg %p77
        %p189 = pneg %p108
        %p190 = pneg %p105
        %s191 = sand.u32 %s95, 1
        %s192 = scalar_lea.sflag [#allocation4], %s191
        %s193 = sand.u32 %s95, 1
        %s194 = smul.addr %s193, 16
        %s195 = scalar_lea.vmem [#allocation5], %s194
        %s196 = smul.u32 2, %s23
        %p197 = scmp.lt.s32.totalorder %s196, 1
        %s198 = scalar_select %p197, %s196, 1
        %s199 = smul.addr %s198, 8
        %s200 = scalar_lea.vmem %s0, %s199
        %s201 = smul.u32 2, %s23
        %s202 = smul.u32 2, %s23
        %s203 = smul.u32 2, %s23
        %v204 = vld [vmem:[%s200] sm:$0xff]
        %v205 = vld [vmem:[%s200 + $0x8] sm:$0xff]
        %s206 = smul.u32 %s24, 128
        %v207 = vstv %s206
        %v208 = vsub.s32 %v204, %v207
        %v209 = vsub.s32 %v205, %v207
        %v210 = vlaneseq
        %v211 = vand.u32 %v210, 127
        %212 = vset.pattern.permute.xlu0 0
        %213 = vperm.xlu0 %212, %v208
        %v214 = vpop.permute.xlu0 %213
        %215 = vset.pattern.permute.xlu0 0
        %216 = vperm.xlu0 %215, %v209
        %v217 = vpop.permute.xlu0 %216
        %vm218 = vcmp.eq.s32.totalorder %v211, %v214
        %vm219 = vcmp.eq.s32.totalorder %v211, %v217
        %v220 = vld [vmem:[%s170] sm:$0xff]
        %v221 = vld [vmem:[%s170 + $0x8] sm:$0xff]
        %v222 = vmul.f32 %v220, 64.0
        %v223 = vmul.f32 %v221, 64.0
        %v224 = vsel %vm218, 25.6, 0.0
        %v225 = vsel %vm219, 25.6, 0.0
        %v226 = vsub.f32 %v222, %v224
        %v227 = vsub.f32 %v223, %v225
        %228 = vst [vmem:[%s195] sm:$0xff] %v226
        %229 = vst [vmem:[%s195 + $0x8] sm:$0xff] %v227
        %s230 = sand.u32 %s95, 1
        %s231 = scalar_lea.sflag [#allocation4], %s230
        %s232 = sand.u32 %s95, 1
        %s233 = smul.addr %s232, 16
        %s234 = scalar_lea.vmem [#allocation5], %s233
        // Predicated region
        $region33: #{tpu_custom_call.1} parent=27 // pred_check
          %p235 = pneg %p105
        $region34: #{tpu_custom_call.1} parent=27 // pred_check_branch
          %237 = sbr.rel (%p235) target = $region36
        $region35: #{tpu_custom_call.1} parent=27 // pred_region
          %s238 = smul.u32 2, %s23
          %s240 = ssub.s32 256, 256
          %241 = vsyncadd %s231, %s240
          %s242 = smul.addr %s238, 2
          %s243 = sadd.s32 %s24, %s242
          %s244 = smul.addr %s243, 128
          %s245 = scalar_lea.hbm %s2, %s244
          %s246 = sshll.u32 %s234, 4
          %s247 = int_to_ptr.vmem [resolvable:$true] %s246
          %252 = dma.vmem_to_hbm [thread:$0]  %s247, 256, %s245, %s231, 128, 256, 8
        $region36: #{tpu_custom_call.1} parent=27 // pred_fallthru
          _
      $region28: #{tpu_custom_call.1} parent=5 // pred_fallthru
        _
      %p253 = scmp.le.s32.totalorder 2, %s14
      // Predicated region
      $region37: #{tpu_custom_call.1} parent=5 // pred_check
        %p254 = pneg %p253
      $region38: #{tpu_custom_call.1} parent=5 // pred_check_branch
        %256 = sbr.rel (%p254) target = $region40
      $region39: #{tpu_custom_call.1} parent=5 // pred_region
        %s257 = ssub.s32 %s14, 2
        // Predicated region
        $region41: #{tpu_custom_call.1} parent=39 // pred_check
          %p258 = pneg %p111
        $region42: #{tpu_custom_call.1} parent=39 // pred_check_branch
          %260 = sbr.rel (%p258) target = $region44
        $region43: #{tpu_custom_call.1} parent=39 // pred_region
          %s261 = sand.u32 %s96, 1
          %s262 = scalar_lea.sflag [#allocation4], %s261
          %s263 = sand.u32 %s96, 1
          %s264 = smul.addr %s263, 16
          %s265 = scalar_lea.vmem [#allocation5], %s264
          %266 = dma.done %s262, 256
        $region44: #{tpu_custom_call.1} parent=39 // pred_fallthru
          _
      $region40: #{tpu_custom_call.1} parent=5 // pred_fallthru
        _
    $region6: #{tpu_custom_call.1} parent=1 // loop_footer
      %s18 = sadd.s32 1, %s14
    $region7: #{tpu_custom_call.1} parent=1 // loop_footer_branch
      %13 = sbr.rel target = $region3
    $region8: #{tpu_custom_call.1} parent=1 // loop_exit
      _
    %267 = vsyncpa [#allocation3], 1
    %s268 = scalar_lea.sflag [#allocation3], 1
    %269 = vsyncpa %s268, 1
    %270 = vsyncpa [#allocation4], 1
    %s271 = scalar_lea.sflag [#allocation4], 1
    %272 = vsyncpa %s271, 1

</llo_original>
